<compile_context>
chip_gen: v5e
topology: v5e:2x2
jax: 0.10.0
libtpu: 0.0.40
codegen_flags: <defaults>
</compile_context>

<pallas_src>
import functools

import jax
import jax.numpy as jnp
from jax.experimental import pallas as pl
from jax.experimental.pallas import tpu as pltpu


def _round_up(x, m):
    return ((x + m - 1) // m) * m


# ---------------------------------------------------------------------------
# Pallas kernel: two MXU matmuls with a ReLU in between.
# Grid = (batch blocks i, output-column blocks j); j is the innermost axis.
# ---------------------------------------------------------------------------
def _decoder_kernel(z_ref, T_ref, b1_ref, W2_ref, b2_ref, o_ref, act_ref):
    # z_ref : (Bblk, dim_z)   bf16      T_ref : (dim_z, CL_pad) bf16
    # b1_ref: (1, CL_pad)     f32       W2_ref: (CL_pad, Nblk)  bf16
    # b2_ref: (1, Nblk)       f32       o_ref : (Bblk, Nblk)    f32
    # act_ref: VMEM scratch (Bblk, CL_pad) bf16

    # Stage 1 (fused ConvTranspose1d bank + ReLU): compute once per batch
    # block, cache in VMEM scratch for every column tile j.
    @pl.when(pl.program_id(1) == 0)
    def _():
        a = jnp.dot(z_ref[...], T_ref[...], preferred_element_type=jnp.float32)
        a = jnp.maximum(a + b1_ref[...], 0.0)
        act_ref[...] = a.astype(act_ref.dtype)

    # Stage 2 (fused concat + Linear): one lane-dense MXU matmul per tile.
    out = jnp.dot(act_ref[...], W2_ref[...], preferred_element_type=jnp.float32)
    o_ref[...] = out + b2_ref[...]


# ---------------------------------------------------------------------------
# One-time parameter fusion (pure data plumbing, done in the JAX wrapper).
# ---------------------------------------------------------------------------
def _build_fused_params(conv_ws, conv_bs, wl_t, bl, dim_z, kernel_sizes,
                        seq_len, cl_pad, sc_pad):
    C = conv_ws[0].shape[0]
    S = seq_len
    L_total = sum(dim_z + k - 1 for k in kernel_sizes)
    CL, SC = C * L_total, S * C

    T_parts, b_parts = [], []
    for w, b, k in zip(conv_ws, conv_bs, kernel_sizes):
        L = dim_z + k - 1
        t = jnp.arange(L)[None, :]
        j = jnp.arange(dim_z)[:, None]
        idx = t - j                                       # (dim_z, L)
        valid = (idx >= 0) & (idx < k)
        # Toeplitz matrix of the "full" convolution: wt[c, j, t] = w[c, t-j]
        wt = jnp.where(valid[None, :, :], w[:, jnp.clip(idx, 0, k - 1)], 0.0)
        T_parts.append(wt)                                # (C, dim_z, L)
        b_parts.append(jnp.broadcast_to(b, (C, L)))       # (C, L)

    # Stage-1 fused weight/bias, column layout = c*L_total + l
    T_cl = jnp.concatenate(T_parts, axis=-1)              # (C, dim_z, L_total)
    T = jnp.transpose(T_cl, (1, 0, 2)).reshape(dim_z, CL)
    b1 = jnp.concatenate(b_parts, axis=-1).reshape(1, CL)

    # Stage-2 block-diagonal weight: W2[c*L_total + l, s*C + c'] = wl_t[l,s]*[c==c']
    eyeC = jnp.eye(C, dtype=jnp.float32)
    W2 = jnp.einsum('ls,cd->clsd', wl_t, eyeC).reshape(CL, SC)
    b2 = jnp.broadcast_to(bl.reshape(S, 1), (S, C)).reshape(1, SC)

    # Lane-align: zero-pad CL -> cl_pad (stage-1 lanes / stage-2 K) and
    # SC -> sc_pad (output lanes) so every load/store is a full 128-lane vector.
    T = jnp.pad(T, ((0, 0), (0, cl_pad - CL)))
    b1 = jnp.pad(b1, ((0, 0), (0, cl_pad - CL)))
    W2 = jnp.pad(W2, ((0, cl_pad - CL), (0, sc_pad - SC)))
    b2 = jnp.pad(b2, ((0, 0), (0, sc_pad - SC)))

    # bf16 operands for the MXU; biases stay f32 (added to f32 accumulators).
    return T.astype(jnp.bfloat16), b1, W2.astype(jnp.bfloat16), b2


# ---------------------------------------------------------------------------
# Wrapper.
# ---------------------------------------------------------------------------
def cnn_decoder_forward(z, conv_ws, conv_bs, wl_t, bl, kernel_sizes, seq_len,
                        block_b=None, block_n=None):
    """Pallas-backed forward.  Returns (B * seq_len, num_aa_types), float32."""
    B, dim_z = z.shape
    C = conv_ws[0].shape[0]
    S = seq_len
    L_total = sum(dim_z + k - 1 for k in kernel_sizes)
    CL, SC = C * L_total, S * C
    CL_pad = _round_up(CL, 128)
    SC_pad = _round_up(SC, 128)

    # Batch block: as large as possible (up to 128 MXU rows), multiple of 16
    # for bf16 sublane packing.  At demo scale this gives a single batch block.
    if block_b is None:
        block_b = min(128, _round_up(B, 16))
    block_b = _round_up(block_b, 16)
    B_pad = _round_up(B, block_b)

    # Output-column tile: largest multiple of 128 that divides SC_pad while
    # keeping the double-buffered bf16 W2 tile under ~8 MiB, so the
    # block-diagonal W2 never needs to be one resident slab (v7x: 64 MiB VMEM).
    if block_n is None:
        m = SC_pad // 128
        per_tile_128 = CL_pad * 128 * 2 * 2          # bytes: bf16, 2 buffers
        cap = max(1, (8 * 1024 * 1024) // per_tile_128)
        d = 1
        for cand in range(min(m, cap), 0, -1):
            if m % cand == 0:
                d = cand
                break
        block_n = 128 * d
    block_n = min(SC_pad, _round_up(block_n, 128))

    conv_ws = [w.astype(jnp.float32) for w in conv_ws]
    conv_bs = [b.astype(jnp.float32) for b in conv_bs]
    T, b1, W2, b2 = _build_fused_params(conv_ws, conv_bs,
                                        wl_t.astype(jnp.float32),
                                        bl.astype(jnp.float32),
                                        dim_z, tuple(kernel_sizes), S,
                                        CL_pad, SC_pad)

    # bf16 activations into the MXU; pad batch so every grid block is full.
    z = z.astype(jnp.bfloat16)
    if B_pad != B:
        z = jnp.pad(z, ((0, B_pad - B), (0, 0)))

    grid = (B_pad // block_b, SC_pad // block_n)

    # VMEM budget from the actual buffers (x2 for double buffering) + headroom,
    # clamped so it is safe on v5e/v6e (128 MiB physical) and v7x (64 MiB).
    need = (2 * block_b * dim_z * 2          # z blocks (bf16)
            + 2 * dim_z * CL_pad * 2         # T (bf16)
            + 2 * CL_pad * 4                 # b1 (f32)
            + 2 * CL_pad * block_n * 2       # W2 tile (bf16)
            + 2 * block_n * 4                # b2 tile (f32)
            + 2 * block_b * block_n * 4      # output tile (f32)
            + block_b * CL_pad * 2)          # act scratch (bf16)
    vmem_limit = int(min(96 * 1024 * 1024, max(32 * 1024 * 1024, 2 * need)))

    out = pl.pallas_call(
        _decoder_kernel,
        out_shape=jax.ShapeDtypeStruct((B_pad, SC_pad), jnp.float32),
        grid_spec=pltpu.PrefetchScalarGridSpec(
            num_scalar_prefetch=0,
            grid=grid,
            in_specs=[
                pl.BlockSpec((block_b, dim_z), lambda i, j: (i, 0)),    # z
                pl.BlockSpec((dim_z, CL_pad), lambda i, j: (0, 0)),     # T
                pl.BlockSpec((1, CL_pad), lambda i, j: (0, 0)),         # b1
                pl.BlockSpec((CL_pad, block_n), lambda i, j: (0, j)),   # W2 tile
                pl.BlockSpec((1, block_n), lambda i, j: (0, j)),        # b2 tile
            ],
            out_specs=pl.BlockSpec((block_b, block_n), lambda i, j: (i, j)),
            scratch_shapes=[pltpu.VMEM((block_b, CL_pad), jnp.bfloat16)],
        ),
        compiler_params=pltpu.CompilerParams(
            # batch blocks independent; column axis reuses the cached activation
            dimension_semantics=("parallel", "arbitrary"),
            vmem_limit_bytes=vmem_limit,
        ),
    )(z, T, b1, W2, b2)

    # Strip lane padding; (B, S*C) -> (B*S, C) is a pure row-major view reshape
    # matching torch's permute(0,2,1)+reshape(-1, C):
    #   out[b, s*C + c] == torch_out[b, c, s]
    return out[:B, :SC].reshape(B * S, C)


# ---------------------------------------------------------------------------
# Plain-JAX f32 reference (Toeplitz formulation of ConvTranspose1d).
# ---------------------------------------------------------------------------
def reference_forward(z, conv_ws, conv_bs, wl_t, bl):
    B, dz = z.shape
    C = conv_ws[0].shape[0]
    outs = []
    for w, b in zip(conv_ws, conv_bs):
        k = w.shape[1]
        L = dz + k - 1
        t = jnp.arange(L)[None, :]
        j = jnp.arange(dz)[:, None]
        idx = t - j
        valid = (idx >= 0) & (idx < k)
        wt = jnp.where(valid[None, :, :], w[:, jnp.clip(idx, 0, k - 1)], 0.0)
        o = jnp.einsum('bj,cjt->bct', z, wt,
                       precision=jax.lax.Precision.HIGHEST) + b.reshape(1, C, 1)
        outs.append(jax.nn.relu(o))
    comb = jnp.concatenate(outs, axis=-1)                 # (B, C, L_total)
    out = jnp.einsum('bcl,ls->bcs', comb, wl_t,
                     precision=jax.lax.Precision.HIGHEST) + bl.reshape(1, 1, -1)
    return jnp.transpose(out, (0, 2, 1)).reshape(-1, C)


if __name__ == "__main__":
    # Small, module-consistent configuration.
    B = 12                       # pads to a single 16-row batch block
    dim_z = 16
    kernel_sizes = (3, 5, 7)
    seq_len = 8
    num_aa_types = 8
    L_total = sum(dim_z + k - 1 for k in kernel_sizes)    # 60

    key = jax.random.PRNGKey(0)
    n = len(kernel_sizes)
    keys = jax.random.split(key, 2 * n + 3)

    z = jax.random.normal(keys[0], (B, dim_z), dtype=jnp.float32)

    conv_ws, conv_bs = [], []
    for i, k in enumerate(kernel_sizes):
        conv_ws.append(0.3 * jax.random.normal(
            keys[1 + 2 * i], (num_aa_types, k), dtype=jnp.float32))
        conv_bs.append(0.1 * jax.random.normal(
            keys[2 + 2 * i], (num_aa_types, 1), dtype=jnp.float32))

    # Linear(L_total, seq_len): weight passed pre-transposed as (L_total, seq_len).
    # TODO(synk): PyTorch builds a *fresh* nn.Linear every forward(); here its
    # parameters are fixed, deterministic inputs instead.
    wl_t = 0.1 * jax.random.normal(keys[2 * n + 1], (L_total, seq_len),
                                   dtype=jnp.float32)
    bl = 0.05 * jax.random.normal(keys[2 * n + 2], (1, seq_len),
                                  dtype=jnp.float32)

    fwd = jax.jit(functools.partial(cnn_decoder_forward,
                                    kernel_sizes=kernel_sizes,
                                    seq_len=seq_len))
    out = jax.block_until_ready(fwd(z, conv_ws, conv_bs, wl_t, bl))

    ref = reference_forward(z, conv_ws, conv_bs, wl_t, bl)

    assert out.shape == (B * seq_len, num_aa_types), out.shape
    # bf16 MXU operands with f32 accumulation -> small numerical drift vs the
    # f32 reference; 2e-2 is ample margin for these magnitudes.
    max_err = float(jnp.max(jnp.abs(out - ref)))
    assert jnp.allclose(out, ref, rtol=2e-2, atol=2e-2), max_err

    print("KERNEL_OK")
</pallas_src>

<mosaic_0001>
module attributes {stable_mosaic.version = 11 : i64} {
  func.func @_decoder_kernel(%arg0: i32, %arg1: i32, %arg2: memref<16x16xbf16, #tpu.memory_space<vmem>>, %arg3: memref<16x512xbf16, #tpu.memory_space<vmem>>, %arg4: memref<1x512xf32, #tpu.memory_space<vmem>>, %arg5: memref<512x128xbf16, #tpu.memory_space<vmem>>, %arg6: memref<1x128xf32, #tpu.memory_space<vmem>>, %arg7: memref<16x128xf32, #tpu.memory_space<vmem>>, %arg8: memref<16x512xbf16, #tpu.memory_space<vmem>>) attributes {dimension_semantics = [#tpu.dimension_semantics<parallel>, #tpu.dimension_semantics<arbitrary>], iteration_bounds = array<i64: 1, 1>, scalar_prefetch = 0 : i64, scratch_operands = 1 : i64, tpu.core_type = #tpu.core_type<tc>, window_params = [{transform_indices = @transform_0, window_bounds = array<i64: 16, 16>}, {pipeline_mode = #tpu.pipeline_mode<synchronous>, transform_indices = @transform_1, window_bounds = array<i64: 16, 512>}, {pipeline_mode = #tpu.pipeline_mode<synchronous>, transform_indices = @transform_2, window_bounds = array<i64: 1, 512>}, {transform_indices = @transform_3, window_bounds = array<i64: 512, 128>}, {transform_indices = @transform_4, window_bounds = array<i64: 1, 128>}, {transform_indices = @transform_5, window_bounds = array<i64: 16, 128>}]} {
    %c0_i32 = arith.constant 0 : i32
    %0 = arith.cmpi eq, %arg1, %c0_i32 : i32
    %1 = arith.extui %0 : i1 to i32
    %c0_i32_0 = arith.constant 0 : i32
    %2 = arith.cmpi ne, %1, %c0_i32_0 : i32
    scf.if %2 {
      %c0_8 = arith.constant 0 : index
      %c0_9 = arith.constant 0 : index
      %10 = vector.load %arg2[%c0_8, %c0_9] : memref<16x16xbf16, #tpu.memory_space<vmem>>, vector<16x16xbf16>
      %c0_10 = arith.constant 0 : index
      %c0_11 = arith.constant 0 : index
      %11 = vector.load %arg3[%c0_10, %c0_11] : memref<16x512xbf16, #tpu.memory_space<vmem>>, vector<16x512xbf16>
      %cst_12 = arith.constant dense<0.000000e+00> : vector<16x512xf32>
      %12 = tpu.matmul %10, %11, %cst_12 {dimension_numbers = #tpu.dot_dimension_numbers<[1], [0], [0], [1], [0, 0, 1, 1], [], []>} : vector<16x16xbf16>, vector<16x512xbf16>, vector<16x512xf32> -> vector<16x512xf32>
      %c0_13 = arith.constant 0 : index
      %c0_14 = arith.constant 0 : index
      %13 = vector.load %arg4[%c0_13, %c0_14] : memref<1x512xf32, #tpu.memory_space<vmem>>, vector<1x512xf32>
      %14 = vector.broadcast %13 : vector<1x512xf32> to vector<16x512xf32>
      %15 = arith.addf %12, %14 : vector<16x512xf32>
      %cst_15 = arith.constant 0.000000e+00 : f32
      %16 = vector.broadcast %cst_15 : f32 to vector<16x512xf32>
      %17 = arith.maximumf %15, %16 : vector<16x512xf32>
      %18 = arith.truncf %17 : vector<16x512xf32> to vector<16x512xbf16>
      %c0_16 = arith.constant 0 : index
      %c0_17 = arith.constant 0 : index
      %19 = vector.load %arg8[%c0_16, %c0_17] : memref<16x512xbf16, #tpu.memory_space<vmem>>, vector<16x512xbf16>
      tpu.vector_store %arg8[%c0_16, %c0_17], %18 {strides = array<i32>} : memref<16x512xbf16, #tpu.memory_space<vmem>>, vector<16x512xbf16>,
    } else {
    }
    %c0 = arith.constant 0 : index
    %c0_1 = arith.constant 0 : index
    %3 = vector.load %arg8[%c0, %c0_1] : memref<16x512xbf16, #tpu.memory_space<vmem>>, vector<16x512xbf16>
    %c0_2 = arith.constant 0 : index
    %c0_3 = arith.constant 0 : index
    %4 = vector.load %arg5[%c0_2, %c0_3] : memref<512x128xbf16, #tpu.memory_space<vmem>>, vector<512x128xbf16>
    %cst = arith.constant dense<0.000000e+00> : vector<16x128xf32>
    %5 = tpu.matmul %3, %4, %cst {dimension_numbers = #tpu.dot_dimension_numbers<[1], [0], [0], [1], [0, 0, 1, 1], [], []>} : vector<16x512xbf16>, vector<512x128xbf16>, vector<16x128xf32> -> vector<16x128xf32>
    %c0_4 = arith.constant 0 : index
    %c0_5 = arith.constant 0 : index
    %6 = vector.load %arg6[%c0_4, %c0_5] : memref<1x128xf32, #tpu.memory_space<vmem>>, vector<1x128xf32>
    %7 = vector.broadcast %6 : vector<1x128xf32> to vector<16x128xf32>
    %8 = arith.addf %5, %7 : vector<16x128xf32>
    %c0_6 = arith.constant 0 : index
    %c0_7 = arith.constant 0 : index
    %9 = vector.load %arg7[%c0_6, %c0_7] : memref<16x128xf32, #tpu.memory_space<vmem>>, vector<16x128xf32>
    tpu.vector_store %arg7[%c0_6, %c0_7], %8 {strides = array<i32>} : memref<16x128xf32, #tpu.memory_space<vmem>>, vector<16x128xf32>,
    return
  }
  func.func @transform_0(%arg0: i32, %arg1: i32) -> (i32, i32) {
    %c0_i32 = arith.constant 0 : i32
    %c0_i32_0 = arith.constant 0 : i32
    return %arg0, %c0_i32 : i32, i32
  }
  func.func @transform_1(%arg0: i32, %arg1: i32) -> (i32, i32) {
    %c0_i32 = arith.constant 0 : i32
    %c0_i32_0 = arith.constant 0 : i32
    %c0_i32_1 = arith.constant 0 : i32
    return %c0_i32, %c0_i32_0 : i32, i32
  }
  func.func @transform_2(%arg0: i32, %arg1: i32) -> (i32, i32) {
    %c0_i32 = arith.constant 0 : i32
    %c0_i32_0 = arith.constant 0 : i32
    %c0_i32_1 = arith.constant 0 : i32
    return %c0_i32, %c0_i32_0 : i32, i32
  }
  func.func @transform_3(%arg0: i32, %arg1: i32) -> (i32, i32) {
    %c0_i32 = arith.constant 0 : i32
    %c0_i32_0 = arith.constant 0 : i32
    return %c0_i32, %arg1 : i32, i32
  }
  func.func @transform_4(%arg0: i32, %arg1: i32) -> (i32, i32) {
    %c0_i32 = arith.constant 0 : i32
    %c0_i32_0 = arith.constant 0 : i32
    return %c0_i32, %arg1 : i32, i32
  }
  func.func @transform_5(%arg0: i32, %arg1: i32) -> (i32, i32) {
    %c0_i32 = arith.constant 0 : i32
    return %arg0, %arg1 : i32, i32
  }
}

</mosaic_0001>

<llo_original>
// kernel: cnn_decoder_forward.1
$region0: #{cnn_decoder_forward.1}
  #allocation0 [shape = 'u32[]', space=smem, size = 0x4, offset = 0x4, fixed_abs, tag = 'smem constant byte address 0x4 - core index']
  #allocation1 [shape = 'u32[72,128]{1,0:T(1,128)}', space=vmem, size = 0x9000, scoped, tag = 'internal scratch']
  #allocation2 [shape = 'bf16[16,512]{1,0:T(8,128)(2,1)}', space=vmem, size = 0x4000, scoped, tag = 'scratch operand']
  %s0 = inlined_call_operand.vmem [shape: bf16[16,16], index: 0, kind: input, shape index: {}]
  %s1 = inlined_call_operand.vmem [shape: bf16[16,512], index: 1, kind: input, shape index: {}]
  %s2 = inlined_call_operand.vmem [shape: f32[1,512], index: 2, kind: input, shape index: {}]
  %s3 = inlined_call_operand.vmem [shape: bf16[512,128], index: 3, kind: input, shape index: {}]
  %s4 = inlined_call_operand.vmem [shape: f32[1,128], index: 4, kind: input, shape index: {}]
  %s5 = inlined_call_operand.vmem [shape: f32[16,128], index: 5, kind: output, shape index: {}]
  %s6 = sld [smem:[#allocation0]]
  $region34: #{cnn_decoder_forward.1} parent=0
    _
  %s8 = ssub.s32 1, %s6
  %s9 = scalar_select 0, %s8, %s6
  // Predicated region
  $region2: #{cnn_decoder_forward.1} parent=0 // pred_check
    _
  $region3: #{cnn_decoder_forward.1} parent=0 // pred_check_branch
    %11 = sbr.rel (0) target = $region5
  $region4: #{cnn_decoder_forward.1} parent=0 // pred_region
    _
  $region5: #{cnn_decoder_forward.1} parent=0 // pred_fallthru
    _
  // Predicated region
  $region6: #{cnn_decoder_forward.1} parent=0 // pred_check
    _
  $region7: #{cnn_decoder_forward.1} parent=0 // pred_check_branch
    %13 = sbr.rel (0) target = $region9
  $region8: #{cnn_decoder_forward.1} parent=0 // pred_region
    _
  $region9: #{cnn_decoder_forward.1} parent=0 // pred_fallthru
    _
  // Predicated region
  $region10: #{cnn_decoder_forward.1} parent=0 // pred_check
    _
  $region11: #{cnn_decoder_forward.1} parent=0 // pred_check_branch
    %15 = sbr.rel (0) target = $region13
  $region12: #{cnn_decoder_forward.1} parent=0 // pred_region
    _
  $region13: #{cnn_decoder_forward.1} parent=0 // pred_fallthru
    _
  // Predicated region
  $region14: #{cnn_decoder_forward.1} parent=0 // pred_check
    _
  $region15: #{cnn_decoder_forward.1} parent=0 // pred_check_branch
    %17 = sbr.rel (0) target = $region17
  $region16: #{cnn_decoder_forward.1} parent=0 // pred_region
    _
  $region17: #{cnn_decoder_forward.1} parent=0 // pred_fallthru
    _
  // Predicated region
  $region18: #{cnn_decoder_forward.1} parent=0 // pred_check
    _
  $region19: #{cnn_decoder_forward.1} parent=0 // pred_check_branch
    %19 = sbr.rel (0) target = $region21
  $region20: #{cnn_decoder_forward.1} parent=0 // pred_region
    _
  $region21: #{cnn_decoder_forward.1} parent=0 // pred_fallthru
    _
  %p21 = scmp.eq.s32.totalorder 0, 0
  // Predicated region
  $region22: #{cnn_decoder_forward.1} parent=0 // pred_check
    %p22 = pneg %p21
  $region23: #{cnn_decoder_forward.1} parent=0 // pred_check_branch
    %24 = sbr.rel (%p22) target = $region25
  $region24: #{cnn_decoder_forward.1} parent=0 // pred_region
    %v25 = vld [vmem:[%s0] sm:$0xf]
    %v26 = vld [vmem:[%s0 + $0x4] sm:$0xf]
    %v27 = vld [vmem:[%s1] sm:$0xff]
    %v28 = vld [vmem:[%s1 + $0x8] sm:$0xff]
    %v29 = vld [vmem:[%s1 + $0x10] sm:$0xff]
    %v30 = vld [vmem:[%s1 + $0x18] sm:$0xff]
    %v31 = vld [vmem:[%s2] sm:$0xf]
    %v33 = vperm.slane %v31, 0
    %v34 = vperm.slane %v31, 1
    %v35 = vperm.slane %v31, 2
    %v36 = vperm.slane %v31, 3
    %v43 = vunpack.c.l.b16 %v25
    %v44 = vunpack.c.l.b16 %v26
    %v45 = vpack.c.b16 %v44, %v43
    %v50 = vunpack.c.l.b16 %v27
    %v51 = vunpack.c.h.b16 %v27
    %v52 = vunpack.c.l.b16 %v28
    %v53 = vunpack.c.h.b16 %v28
    %v54 = vunpack.c.l.b16 %v29
    %v55 = vunpack.c.h.b16 %v29
    %v56 = vunpack.c.l.b16 %v30
    %v57 = vunpack.c.h.b16 %v30
    %v58 = vpack.c.b16 %v54, %v50
    %v59 = vpack.c.b16 %v55, %v51
    %v60 = vpack.c.b16 %v56, %v52
    %v61 = vpack.c.b16 %v57, %v53
    %vm66 = vcmask 130048
    %v68 = vsel %vm66, %v45, 0
    %70 = vmatpush.bf16.msra.mxu0 0
    %71 = vmatpush.bf16.msra.mxu0 0
    %72 = vmatpush.bf16.msra.mxu0 0
    %73 = vmatpush.bf16.msra.mxu0 0
    %74 = vmatpush.bf16.msra.mxu0 0
    %75 = vmatpush.bf16.msra.mxu0 0
    %76 = vmatpush.bf16.msra.mxu0 0
    %77 = vmatpush.bf16.msra.mxu0 %v58
    %78 = vmatmul.bf16.gmra.mxu0 %v68
    %v79 = vpop.f32.mrf.mxu0
    %v80 = vadd.f32 %v33, %v79
    %v81 = vpop.f32.mrf.mxu0
    %v82 = vadd.f32 %v33, %v81
    %83 = vdwg.mxu0
    %84 = vmatpush.bf16.msra.mxu0 0
    %85 = vmatpush.bf16.msra.mxu0 0
    %86 = vmatpush.bf16.msra.mxu0 0
    %87 = vmatpush.bf16.msra.mxu0 0
    %88 = vmatpush.bf16.msra.mxu0 0
    %89 = vmatpush.bf16.msra.mxu0 0
    %90 = vmatpush.bf16.msra.mxu0 0
    %91 = vmatpush.bf16.msra.mxu0 %v59
    %92 = vmatmul.bf16.gmra.mxu0 %v68
    %v93 = vpop.f32.mrf.mxu0
    %v94 = vadd.f32 %v34, %v93
    %v95 = vpop.f32.mrf.mxu0
    %v96 = vadd.f32 %v34, %v95
    %97 = vdwg.mxu0
    %98 = vmatpush.bf16.msra.mxu0 0
    %99 = vmatpush.bf16.msra.mxu0 0
    %100 = vmatpush.bf16.msra.mxu0 0
    %101 = vmatpush.bf16.msra.mxu0 0
    %102 = vmatpush.bf16.msra.mxu0 0
    %103 = vmatpush.bf16.msra.mxu0 0
    %104 = vmatpush.bf16.msra.mxu0 0
    %105 = vmatpush.bf16.msra.mxu0 %v60
    %106 = vmatmul.bf16.gmra.mxu0 %v68
    %v107 = vpop.f32.mrf.mxu0
    %v108 = vadd.f32 %v35, %v107
    %v109 = vpop.f32.mrf.mxu0
    %v110 = vadd.f32 %v35, %v109
    %111 = vdwg.mxu0
    %112 = vmatpush.bf16.msra.mxu0 0
    %113 = vmatpush.bf16.msra.mxu0 0
    %114 = vmatpush.bf16.msra.mxu0 0
    %115 = vmatpush.bf16.msra.mxu0 0
    %116 = vmatpush.bf16.msra.mxu0 0
    %117 = vmatpush.bf16.msra.mxu0 0
    %118 = vmatpush.bf16.msra.mxu0 0
    %119 = vmatpush.bf16.msra.mxu0 %v61
    %120 = vmatmul.bf16.gmra.mxu0 %v68
    %v121 = vpop.f32.mrf.mxu0
    %v122 = vadd.f32 %v36, %v121
    %v123 = vpop.f32.mrf.mxu0
    %v124 = vadd.f32 %v36, %v123
    %125 = vdwg.mxu0
    %v126 = vmax.f32 %v80, 0.0
    %v127 = vmax.f32 %v94, 0.0
    %v128 = vmax.f32 %v108, 0.0
    %v129 = vmax.f32 %v122, 0.0
    %v130 = vmax.f32 %v82, 0.0
    %v131 = vmax.f32 %v96, 0.0
    %v132 = vmax.f32 %v110, 0.0
    %v133 = vmax.f32 %v124, 0.0
    %v134 = vpack.c.bf16 %v127, %v126
    %v135 = vpack.c.bf16 %v129, %v128
    %v136 = vpack.c.bf16 %v131, %v130
    %v137 = vpack.c.bf16 %v133, %v132
    %138 = vst [vmem:[#allocation2] sm:$0xff] %v134
    %139 = vst [vmem:[#allocation2 + $0x8] sm:$0xff] %v135
    %140 = vst [vmem:[#allocation2 + $0x10] sm:$0xff] %v136
    %141 = vst [vmem:[#allocation2 + $0x18] sm:$0xff] %v137
  $region25: #{cnn_decoder_forward.1} parent=0 // pred_fallthru
    _
  %v142 = vld [vmem:[#allocation2] sm:$0xff]
  %v143 = vld [vmem:[#allocation2 + $0x8] sm:$0xff]
  %v144 = vld [vmem:[#allocation2 + $0x10] sm:$0xff]
  %v145 = vld [vmem:[#allocation2 + $0x18] sm:$0xff]
  %v146 = vld [vmem:[%s3] sm:$0xf]
  %v147 = vld [vmem:[%s3 + $0x4] sm:$0xf]
  %v148 = vld [vmem:[%s3 + $0x8] sm:$0xf]
  %v149 = vld [vmem:[%s3 + $0xc] sm:$0xf]
  %v150 = vld [vmem:[%s3 + $0x10] sm:$0xf]
  %v151 = vld [vmem:[%s3 + $0x14] sm:$0xf]
  %v152 = vld [vmem:[%s3 + $0x18] sm:$0xf]
  %v153 = vld [vmem:[%s3 + $0x1c] sm:$0xf]
  %v154 = vld [vmem:[%s3 + $0x20] sm:$0xf]
  %v155 = vld [vmem:[%s3 + $0x24] sm:$0xf]
  %v156 = vld [vmem:[%s3 + $0x28] sm:$0xf]
  %v157 = vld [vmem:[%s3 + $0x2c] sm:$0xf]
  %v158 = vld [vmem:[%s3 + $0x30] sm:$0xf]
  %v159 = vld [vmem:[%s3 + $0x34] sm:$0xf]
  %v160 = vld [vmem:[%s3 + $0x38] sm:$0xf]
  %v161 = vld [vmem:[%s3 + $0x3c] sm:$0xf]
  %v162 = vld [vmem:[%s3 + $0x40] sm:$0xf]
  %v163 = vld [vmem:[%s3 + $0x44] sm:$0xf]
  %v164 = vld [vmem:[%s3 + $0x48] sm:$0xf]
  %v165 = vld [vmem:[%s3 + $0x4c] sm:$0xf]
  %v166 = vld [vmem:[%s3 + $0x50] sm:$0xf]
  %v167 = vld [vmem:[%s3 + $0x54] sm:$0xf]
  %v168 = vld [vmem:[%s3 + $0x58] sm:$0xf]
  %v169 = vld [vmem:[%s3 + $0x5c] sm:$0xf]
  %v170 = vld [vmem:[%s3 + $0x60] sm:$0xf]
  %v171 = vld [vmem:[%s3 + $0x64] sm:$0xf]
  %v172 = vld [vmem:[%s3 + $0x68] sm:$0xf]
  %v173 = vld [vmem:[%s3 + $0x6c] sm:$0xf]
  %v174 = vld [vmem:[%s3 + $0x70] sm:$0xf]
  %v175 = vld [vmem:[%s3 + $0x74] sm:$0xf]
  %v176 = vld [vmem:[%s3 + $0x78] sm:$0xf]
  %v177 = vld [vmem:[%s3 + $0x7c] sm:$0xf]
  %v178 = vld [vmem:[%s3 + $0x80] sm:$0xf]
  %v179 = vld [vmem:[%s3 + $0x84] sm:$0xf]
  %v180 = vld [vmem:[%s3 + $0x88] sm:$0xf]
  %v181 = vld [vmem:[%s3 + $0x8c] sm:$0xf]
  %v182 = vld [vmem:[%s3 + $0x90] sm:$0xf]
  %v183 = vld [vmem:[%s3 + $0x94] sm:$0xf]
  %v184 = vld [vmem:[%s3 + $0x98] sm:$0xf]
  %v185 = vld [vmem:[%s3 + $0x9c] sm:$0xf]
  %v186 = vld [vmem:[%s3 + $0xa0] sm:$0xf]
  %v187 = vld [vmem:[%s3 + $0xa4] sm:$0xf]
  %v188 = vld [vmem:[%s3 + $0xa8] sm:$0xf]
  %v189 = vld [vmem:[%s3 + $0xac] sm:$0xf]
  %v190 = vld [vmem:[%s3 + $0xb0] sm:$0xf]
  %v191 = vld [vmem:[%s3 + $0xb4] sm:$0xf]
  %v192 = vld [vmem:[%s3 + $0xb8] sm:$0xf]
  %v193 = vld [vmem:[%s3 + $0xbc] sm:$0xf]
  %v194 = vld [vmem:[%s3 + $0xc0] sm:$0xf]
  %v195 = vld [vmem:[%s3 + $0xc4] sm:$0xf]
  %v196 = vld [vmem:[%s3 + $0xc8] sm:$0xf]
  %v197 = vld [vmem:[%s3 + $0xcc] sm:$0xf]
  %v198 = vld [vmem:[%s3 + $0xd0] sm:$0xf]
  %v199 = vld [vmem:[%s3 + $0xd4] sm:$0xf]
  %v200 = vld [vmem:[%s3 + $0xd8] sm:$0xf]
  %v201 = vld [vmem:[%s3 + $0xdc] sm:$0xf]
  %v202 = vld [vmem:[%s3 + $0xe0] sm:$0xf]
  %v203 = vld [vmem:[%s3 + $0xe4] sm:$0xf]
  %v204 = vld [vmem:[%s3 + $0xe8] sm:$0xf]
  %v205 = vld [vmem:[%s3 + $0xec] sm:$0xf]
  %v206 = vld [vmem:[%s3 + $0xf0] sm:$0xf]
  %v207 = vld [vmem:[%s3 + $0xf4] sm:$0xf]
  %v208 = vld [vmem:[%s3 + $0xf8] sm:$0xf]
  %v209 = vld [vmem:[%s3 + $0xfc] sm:$0xf]
  %v210 = vld [vmem:[%s4] sm:$0x1]
  %v212 = vperm.slane %v210, 0
  %v218 = vunpack.c.l.b16 %v142
  %v219 = vunpack.c.h.b16 %v142
  %v220 = vunpack.c.l.b16 %v143
  %v221 = vunpack.c.h.b16 %v143
  %v222 = vunpack.c.l.b16 %v144
  %v223 = vunpack.c.h.b16 %v144
  %v224 = vunpack.c.l.b16 %v145
  %v225 = vunpack.c.h.b16 %v145
  %v226 = vpack.c.b16 %v222, %v218
  %v227 = vpack.c.b16 %v223, %v219
  %v228 = vpack.c.b16 %v224, %v220
  %v229 = vpack.c.b16 %v225, %v221
  %v298 = vunpack.c.l.b16 %v146
  %v299 = vunpack.c.l.b16 %v147
  %v300 = vunpack.c.l.b16 %v148
  %v301 = vunpack.c.l.b16 %v149
  %v302 = vunpack.c.l.b16 %v150
  %v303 = vunpack.c.l.b16 %v151
  %v304 = vunpack.c.l.b16 %v152
  %v305 = vunpack.c.l.b16 %v153
  %v306 = vunpack.c.l.b16 %v154
  %v307 = vunpack.c.l.b16 %v155
  %v308 = vunpack.c.l.b16 %v156
  %v309 = vunpack.c.l.b16 %v157
  %v310 = vunpack.c.l.b16 %v158
  %v311 = vunpack.c.l.b16 %v159
  %v312 = vunpack.c.l.b16 %v160
  %v313 = vunpack.c.l.b16 %v161
  %v314 = vunpack.c.l.b16 %v162
  %v315 = vunpack.c.l.b16 %v163
  %v316 = vunpack.c.l.b16 %v164
  %v317 = vunpack.c.l.b16 %v165
  %v318 = vunpack.c.l.b16 %v166
  %v319 = vunpack.c.l.b16 %v167
  %v320 = vunpack.c.l.b16 %v168
  %v321 = vunpack.c.l.b16 %v169
  %v322 = vunpack.c.l.b16 %v170
  %v323 = vunpack.c.l.b16 %v171
  %v324 = vunpack.c.l.b16 %v172
  %v325 = vunpack.c.l.b16 %v173
  %v326 = vunpack.c.l.b16 %v174
  %v327 = vunpack.c.l.b16 %v175
  %v328 = vunpack.c.l.b16 %v176
  %v329 = vunpack.c.l.b16 %v177
  %v330 = vunpack.c.l.b16 %v178
  %v331 = vunpack.c.l.b16 %v179
  %v332 = vunpack.c.l.b16 %v180
  %v333 = vunpack.c.l.b16 %v181
  %v334 = vunpack.c.l.b16 %v182
  %v335 = vunpack.c.l.b16 %v183
  %v336 = vunpack.c.l.b16 %v184
  %v337 = vunpack.c.l.b16 %v185
  %v338 = vunpack.c.l.b16 %v186
  %v339 = vunpack.c.l.b16 %v187
  %v340 = vunpack.c.l.b16 %v188
  %v341 = vunpack.c.l.b16 %v189
  %v342 = vunpack.c.l.b16 %v190
  %v343 = vunpack.c.l.b16 %v191
  %v344 = vunpack.c.l.b16 %v192
  %v345 = vunpack.c.l.b16 %v193
  %v346 = vunpack.c.l.b16 %v194
  %v347 = vunpack.c.l.b16 %v195
  %v348 = vunpack.c.l.b16 %v196
  %v349 = vunpack.c.l.b16 %v197
  %v350 = vunpack.c.l.b16 %v198
  %v351 = vunpack.c.l.b16 %v199
  %v352 = vunpack.c.l.b16 %v200
  %v353 = vunpack.c.l.b16 %v201
  %v354 = vunpack.c.l.b16 %v202
  %v355 = vunpack.c.l.b16 %v203
  %v356 = vunpack.c.l.b16 %v204
  %v357 = vunpack.c.l.b16 %v205
  %v358 = vunpack.c.l.b16 %v206
  %v359 = vunpack.c.l.b16 %v207
  %v360 = vunpack.c.l.b16 %v208
  %v361 = vunpack.c.l.b16 %v209
  %v362 = vpack.c.b16 %v299, %v298
  %v363 = vpack.c.b16 %v301, %v300
  %v364 = vpack.c.b16 %v303, %v302
  %v365 = vpack.c.b16 %v305, %v304
  %v366 = vpack.c.b16 %v307, %v306
  %v367 = vpack.c.b16 %v309, %v308
  %v368 = vpack.c.b16 %v311, %v310
  %v369 = vpack.c.b16 %v313, %v312
  %v370 = vpack.c.b16 %v315, %v314
  %v371 = vpack.c.b16 %v317, %v316
  %v372 = vpack.c.b16 %v319, %v318
  %v373 = vpack.c.b16 %v321, %v320
  %v374 = vpack.c.b16 %v323, %v322
  %v375 = vpack.c.b16 %v325, %v324
  %v376 = vpack.c.b16 %v327, %v326
  %v377 = vpack.c.b16 %v329, %v328
  %v378 = vpack.c.b16 %v331, %v330
  %v379 = vpack.c.b16 %v333, %v332
  %v380 = vpack.c.b16 %v335, %v334
  %v381 = vpack.c.b16 %v337, %v336
  %v382 = vpack.c.b16 %v339, %v338
  %v383 = vpack.c.b16 %v341, %v340
  %v384 = vpack.c.b16 %v343, %v342
  %v385 = vpack.c.b16 %v345, %v344
  %v386 = vpack.c.b16 %v347, %v346
  %v387 = vpack.c.b16 %v349, %v348
  %v388 = vpack.c.b16 %v351, %v350
  %v389 = vpack.c.b16 %v353, %v352
  %v390 = vpack.c.b16 %v355, %v354
  %v391 = vpack.c.b16 %v357, %v356
  %v392 = vpack.c.b16 %v359, %v358
  %v393 = vpack.c.b16 %v361, %v360
  %426 = vmatpush.bf16.msra.mxu0 %v369
  %427 = vmatpush.bf16.msra.mxu0 %v368
  %428 = vmatpush.bf16.msra.mxu0 %v367
  %429 = vmatpush.bf16.msra.mxu0 %v366
  %430 = vmatpush.bf16.msra.mxu0 %v365
  %431 = vmatpush.bf16.msra.mxu0 %v364
  %432 = vmatpush.bf16.msra.mxu0 %v363
  %433 = vmatpush.bf16.msra.mxu0 %v362
  %434 = vmatmul.bf16.gmra.mxu0 %v226
  %v435 = vpop.f32.mrf.mxu0
  %v436 = vadd.f32 %v212, %v435
  %v437 = vpop.f32.mrf.mxu0
  %v438 = vadd.f32 %v212, %v437
  %439 = vdwg.mxu0
  %440 = vmatpush.bf16.msra.mxu0 %v377
  %441 = vmatpush.bf16.msra.mxu0 %v376
  %442 = vmatpush.bf16.msra.mxu0 %v375
  %443 = vmatpush.bf16.msra.mxu0 %v374
  %444 = vmatpush.bf16.msra.mxu0 %v373
  %445 = vmatpush.bf16.msra.mxu0 %v372
  %446 = vmatpush.bf16.msra.mxu0 %v371
  %447 = vmatpush.bf16.msra.mxu0 %v370
  %448 = vmatmul.bf16.gmra.mxu0 %v227
  %v449 = vpop.f32.mrf.mxu0
  %v450 = vadd.f32 %v436, %v449
  %v451 = vpop.f32.mrf.mxu0
  %v452 = vadd.f32 %v438, %v451
  %453 = vdwg.mxu0
  %454 = vmatpush.bf16.msra.mxu0 %v385
  %455 = vmatpush.bf16.msra.mxu0 %v384
  %456 = vmatpush.bf16.msra.mxu0 %v383
  %457 = vmatpush.bf16.msra.mxu0 %v382
  %458 = vmatpush.bf16.msra.mxu0 %v381
  %459 = vmatpush.bf16.msra.mxu0 %v380
  %460 = vmatpush.bf16.msra.mxu0 %v379
  %461 = vmatpush.bf16.msra.mxu0 %v378
  %462 = vmatmul.bf16.gmra.mxu0 %v228
  %v463 = vpop.f32.mrf.mxu0
  %v464 = vadd.f32 %v450, %v463
  %v465 = vpop.f32.mrf.mxu0
  %v466 = vadd.f32 %v452, %v465
  %467 = vdwg.mxu0
  %468 = vmatpush.bf16.msra.mxu0 %v393
  %469 = vmatpush.bf16.msra.mxu0 %v392
  %470 = vmatpush.bf16.msra.mxu0 %v391
  %471 = vmatpush.bf16.msra.mxu0 %v390
  %472 = vmatpush.bf16.msra.mxu0 %v389
  %473 = vmatpush.bf16.msra.mxu0 %v388
  %474 = vmatpush.bf16.msra.mxu0 %v387
  %475 = vmatpush.bf16.msra.mxu0 %v386
  %476 = vmatmul.bf16.gmra.mxu0 %v229
  %v477 = vpop.f32.mrf.mxu0
  %v478 = vadd.f32 %v464, %v477
  %v479 = vpop.f32.mrf.mxu0
  %v480 = vadd.f32 %v466, %v479
  %481 = vdwg.mxu0
  %482 = vst [vmem:[%s5] sm:$0xff] %v478
  %483 = vst [vmem:[%s5 + $0x8] sm:$0xff] %v480
  // Predicated region
  $region26: #{cnn_decoder_forward.1} parent=0 // pred_check
    _
  $region27: #{cnn_decoder_forward.1} parent=0 // pred_check_branch
    %485 = sbr.rel (0) target = $region29
  $region28: #{cnn_decoder_forward.1} parent=0 // pred_region
    _
  $region29: #{cnn_decoder_forward.1} parent=0 // pred_fallthru
    _
  // Predicated region
  $region30: #{cnn_decoder_forward.1} parent=0 // pred_check
    _
  $region31: #{cnn_decoder_forward.1} parent=0 // pred_check_branch
    %487 = sbr.rel (0) target = $region33
  $region32: #{cnn_decoder_forward.1} parent=0 // pred_region
    _
  $region33: #{cnn_decoder_forward.1} parent=0 // pred_fallthru
    _

</llo_original>
